<compile_context>
chip_gen: v7x
topology: tpu7x:2x2x1
jax: 0.10.0
libtpu: 0.0.40
codegen_flags: <defaults>
</compile_context>

<pallas_src>
import functools
import math

import jax
import jax.numpy as jnp
import numpy as np
from jax.experimental import pallas as pl
from jax.experimental.pallas import tpu as pltpu


def _round_up(x, m):
    return ((x + m - 1) // m) * m


def _token_embedding_kernel(x_ref, w_ref, o_ref, *, tile_len):
    # x_ref : (1, Lext, C)  circularly-extended input (x_ext[j] = x[(j-1) mod L]),
    #                       resident per batch element (block index constant in t).
    # w_ref : (3C, D)       fused tap-major weights, resident for the whole kernel.
    # o_ref : (1, TL, D)    output tile.
    t = pl.program_id(1)
    start = pl.multiple_of(t * tile_len, 8)

    xp = x_ref[0, pl.ds(start, tile_len), :]          # x[(l-1) mod L]   (TL, C)
    xc = x_ref[0, pl.ds(start + 1, tile_len), :]      # x[l]             (TL, C)
    xn = x_ref[0, pl.ds(start + 2, tile_len), :]      # x[(l+1) mod L]   (TL, C)

    lhs = jnp.concatenate([xp, xc, xn], axis=-1)      # (TL, 3C), tap-major columns
    o_ref[0] = jnp.dot(lhs, w_ref[...],
                       preferred_element_type=jnp.float32).astype(o_ref.dtype)


def _vmem_budget_bytes():
    """~75% of physical VMEM (leaves headroom for compiler scratch / semaphores)."""
    cap = 64 * 1024 * 1024  # conservative fallback = v7x per-TC size
    try:
        info = pltpu.get_tpu_info()
        cap = int(getattr(info, "vmem_capacity_bytes", cap))
    except Exception:
        pass
    return int(cap * 0.75)


def _choose_tile(L, C, D, budget, target=2048):
    """Largest multiple-of-8 sequence tile <= target that fits the VMEM budget,
    using (8,128)-padded footprints (inputs/outputs are double-buffered)."""
    lane_C = _round_up(C, 128)
    lane_D = _round_up(D, 128)
    # Resident x_ext block (worst case Lp <= L + target) + fused weight, x2 buffers.
    fixed = (2 * _round_up(L + target + 2, 8) * lane_C * 4
             + 2 * _round_up(3 * C, 8) * lane_D * 4)
    per_row = 2 * lane_D * 4                      # one output row, double-buffered
    avail = budget - fixed - (4 << 20)            # extra headroom
    tl = avail // per_row if avail > 0 else 8
    tl = max(8, min(target, (tl // 8) * 8))
    tl = min(tl, _round_up(L, 8))
    return int(tl)


def token_embedding(x, weight, *, max_tile=2048):
    """x: (B, L, c_in) f32; weight: (d_model, c_in, 3) f32 (PyTorch Conv1d layout).

    Returns (B, L, d_model), matching TokenEmbedding.forward exactly.
    """
    B, L, C = x.shape
    D, C_w, K = weight.shape
    assert C_w == C and K == 3

    # Fuse the three taps into one (3C, D) matmul weight (tap-major rows).
    w_fused = jnp.transpose(weight, (2, 1, 0)).reshape(3 * C, D)      # (3C, D)

    budget = _vmem_budget_bytes()
    TL = _choose_tile(L, C, D, budget, target=max_tile)
    Lp = _round_up(L, TL)
    NT = Lp // TL
    Lext = Lp + 2

    # Circularly-extended (and, if needed, circularly padded-to-Lp) input:
    #   x_ext[:, j, :] = x[:, (j - 1) mod L, :]
    # Cheap wrapper pass over the small input; makes every tile's windows contiguous.
    idx = (jnp.arange(Lext) - 1) % L
    x_ext = jnp.take(x, idx, axis=1)                                  # (B, Lext, C)

    # VMEM limit from (8,128)-padded footprints (double-buffered), capped at budget.
    lane_D = _round_up(D, 128)
    usage = (2 * _round_up(Lext, 8) * _round_up(C, 128) * 4
             + 2 * _round_up(3 * C, 8) * lane_D * 4
             + 2 * TL * lane_D * 4)
    vmem_limit = int(min(budget, max(32 << 20, int(usage * 1.5) + (8 << 20))))

    kernel = functools.partial(_token_embedding_kernel, tile_len=TL)

    out = pl.pallas_call(
        kernel,
        out_shape=jax.ShapeDtypeStruct((B, Lp, D), x.dtype),
        grid_spec=pltpu.PrefetchScalarGridSpec(
            num_scalar_prefetch=0,
            grid=(B, NT),
            in_specs=[
                # Full extended sequence per batch element; block index constant in t,
                # so it is DMA'd once per batch element and stays resident.
                pl.BlockSpec((1, Lext, C), lambda b, t: (b, 0, 0)),
                # Fused weight, resident for the whole kernel.
                pl.BlockSpec((3 * C, D), lambda b, t: (0, 0)),
            ],
            out_specs=pl.BlockSpec((1, TL, D), lambda b, t: (b, t, 0)),
        ),
        compiler_params=pltpu.CompilerParams(
            # No carried state -> both axes parallel (lets v7x shard across its 2 TCs).
            dimension_semantics=("parallel", "parallel"),
            vmem_limit_bytes=vmem_limit,
        ),
        cost_estimate=pl.CostEstimate(
            flops=2 * B * Lp * 3 * C * D,
            transcendentals=0,
            bytes_accessed=4 * (B * Lext * C + B * Lp * D + 3 * C * D),
        ),
    )(x_ext, w_fused)

    return out if Lp == L else out[:, :L, :]


def _reference(x, weight):
    # Pure-JAX reference: circular-pad + einsum, identical to the PyTorch module.
    x_pad = jnp.concatenate([x[:, -1:, :], x, x[:, :1, :]], axis=1)   # (B, L+2, C)
    L = x.shape[1]
    taps = jnp.stack([x_pad[:, k:k + L, :] for k in range(3)], axis=-1)  # (B, L, C, 3)
    return jnp.einsum('blck,dck->bld', taps, weight)


def _init_weight(key, c_in, d_model):
    # Deterministic kaiming_normal_(mode='fan_in', nonlinearity='leaky_relu') init.
    fan_in = c_in * 3
    gain = math.sqrt(2.0 / (1.0 + 0.01 ** 2))
    std = gain / math.sqrt(fan_in)
    return jax.random.normal(key, (d_model, c_in, 3), dtype=jnp.float32) * std


if __name__ == "__main__":
    key = jax.random.PRNGKey(0)
    k_x, k_w, k_x2, k_w2, k_x3, k_w3 = jax.random.split(key, 6)

    # Small config (single sequence tile per batch element).
    B, L, C, D = 2, 16, 4, 32
    x = jax.random.normal(k_x, (B, L, C), dtype=jnp.float32)
    w = _init_weight(k_w, C, D)
    out = token_embedding(x, w)
    jax.block_until_ready(out)
    np.testing.assert_allclose(np.asarray(out), np.asarray(_reference(x, w)),
                               rtol=1e-5, atol=1e-5)

    # Larger config exercising the big-tile path (TL = 2048, one tile per batch elem).
    B2, L2, C2, D2 = 2, 2048, 4, 128
    x2 = jax.random.normal(k_x2, (B2, L2, C2), dtype=jnp.float32)
    w2 = _init_weight(k_w2, C2, D2)
    out2 = token_embedding(x2, w2)
    jax.block_until_ready(out2)
    np.testing.assert_allclose(np.asarray(out2), np.asarray(_reference(x2, w2)),
                               rtol=1e-4, atol=1e-4)

    # Awkward length: L not a multiple of the tile -> circular padding + multi-tile
    # grid + output slice-back (exercises wrap handling at every tile boundary).
    B3, L3, C3, D3 = 2, 200, 4, 32
    x3 = jax.random.normal(k_x3, (B3, L3, C3), dtype=jnp.float32)
    w3 = _init_weight(k_w3, C3, D3)
    out3 = token_embedding(x3, w3, max_tile=64)
    jax.block_until_ready(out3)
    np.testing.assert_allclose(np.asarray(out3), np.asarray(_reference(x3, w3)),
                               rtol=1e-5, atol=1e-5)

    print("KERNEL_OK")
</pallas_src>

<mosaic_0001>
module attributes {stable_mosaic.version = 11 : i64} {
  func.func @_token_embedding_kernel(%arg0: i32, %arg1: i32, %arg2: memref<1x18x4xf32, #tpu.memory_space<vmem>>, %arg3: memref<12x32xf32, #tpu.memory_space<vmem>>, %arg4: memref<1x16x32xf32, #tpu.memory_space<vmem>>) attributes {dimension_semantics = [#tpu.dimension_semantics<parallel>, #tpu.dimension_semantics<parallel>], iteration_bounds = array<i64: 2, 1>, scalar_prefetch = 0 : i64, scratch_operands = 0 : i64, tpu.core_type = #tpu.core_type<tc>, window_params = [{transform_indices = @transform_0, window_bounds = array<i64: 1, 18, 4>}, {pipeline_mode = #tpu.pipeline_mode<synchronous>, transform_indices = @transform_1, window_bounds = array<i64: 12, 32>}, {transform_indices = @transform_2, window_bounds = array<i64: 1, 16, 32>}]} {
    %c16_i32 = arith.constant 16 : i32
    %0 = arith.muli %arg1, %c16_i32 : i32
    %1 = tpu.assume_multiple %0, 8 : i32
    %c0 = arith.constant 0 : index
    %2 = arith.index_cast %1 : i32 to index
    %c0_0 = arith.constant 0 : index
    %3 = vector.load %arg2[%c0, %2, %c0_0] : memref<1x18x4xf32, #tpu.memory_space<vmem>>, vector<1x16x4xf32>
    %4 = vector.shape_cast %3 : vector<1x16x4xf32> to vector<16x4xf32>
    %c1_i32 = arith.constant 1 : i32
    %5 = arith.addi %1, %c1_i32 : i32
    %c0_1 = arith.constant 0 : index
    %6 = arith.index_cast %5 : i32 to index
    %c0_2 = arith.constant 0 : index
    %7 = vector.load %arg2[%c0_1, %6, %c0_2] : memref<1x18x4xf32, #tpu.memory_space<vmem>>, vector<1x16x4xf32>
    %8 = vector.shape_cast %7 : vector<1x16x4xf32> to vector<16x4xf32>
    %c2_i32 = arith.constant 2 : i32
    %9 = arith.addi %1, %c2_i32 : i32
    %c0_3 = arith.constant 0 : index
    %10 = arith.index_cast %9 : i32 to index
    %c0_4 = arith.constant 0 : index
    %11 = vector.load %arg2[%c0_3, %10, %c0_4] : memref<1x18x4xf32, #tpu.memory_space<vmem>>, vector<1x16x4xf32>
    %12 = vector.shape_cast %11 : vector<1x16x4xf32> to vector<16x4xf32>
    %13 = tpu.concatenate %4, %8, %12 in 1 : vector<16x4xf32>, vector<16x4xf32>, vector<16x4xf32> -> vector<16x12xf32>
    %c0_5 = arith.constant 0 : index
    %c0_6 = arith.constant 0 : index
    %14 = vector.load %arg3[%c0_5, %c0_6] : memref<12x32xf32, #tpu.memory_space<vmem>>, vector<12x32xf32>
    %cst = arith.constant dense<0.000000e+00> : vector<16x32xf32>
    %15 = tpu.matmul %13, %14, %cst {dimension_numbers = #tpu.dot_dimension_numbers<[1], [0], [0], [1], [0, 0, 1, 1], [], []>} : vector<16x12xf32>, vector<12x32xf32>, vector<16x32xf32> -> vector<16x32xf32>
    %c0_7 = arith.constant 0 : index
    %c0_8 = arith.constant 0 : index
    %c0_9 = arith.constant 0 : index
    %16 = vector.load %arg4[%c0_7, %c0_8, %c0_9] : memref<1x16x32xf32, #tpu.memory_space<vmem>>, vector<1x16x32xf32>
    %17 = vector.shape_cast %16 : vector<1x16x32xf32> to vector<16x32xf32>
    %18 = vector.shape_cast %15 : vector<16x32xf32> to vector<1x16x32xf32>
    tpu.vector_store %arg4[%c0_7, %c0_8, %c0_9], %18 {strides = array<i32>} : memref<1x16x32xf32, #tpu.memory_space<vmem>>, vector<1x16x32xf32>,
    return
  }
  func.func @transform_0(%arg0: i32, %arg1: i32) -> (i32, i32, i32) {
    %c0_i32 = arith.constant 0 : i32
    %c0_i32_0 = arith.constant 0 : i32
    %c0_i32_1 = arith.constant 0 : i32
    return %arg0, %c0_i32, %c0_i32_0 : i32, i32, i32
  }
  func.func @transform_1(%arg0: i32, %arg1: i32) -> (i32, i32) {
    %c0_i32 = arith.constant 0 : i32
    %c0_i32_0 = arith.constant 0 : i32
    %c0_i32_1 = arith.constant 0 : i32
    return %c0_i32, %c0_i32_0 : i32, i32
  }
  func.func @transform_2(%arg0: i32, %arg1: i32) -> (i32, i32, i32) {
    %c0_i32 = arith.constant 0 : i32
    %c0_i32_0 = arith.constant 0 : i32
    return %arg0, %arg1, %c0_i32 : i32, i32, i32
  }
}

</mosaic_0001>

<llo_original>
// kernel: tpu_custom_call.1
$region0: #{tpu_custom_call.1}
  #allocation0 [shape = 'u32[]', space=smem, size = 0x4, offset = 0x4, fixed_abs, tag = 'smem constant byte address 0x4 - core index']
  #allocation1 [shape = 'u32[144,128]{1,0:T(1,128)}', space=vmem, size = 0x12000, scoped, tag = 'internal scratch']
  %s0 = inlined_call_operand.vmem [shape: f32[2,18,4], index: 0, kind: input, shape index: {}]
  %s1 = inlined_call_operand.vmem [shape: f32[12,32], index: 1, kind: input, shape index: {}]
  %s2 = inlined_call_operand.hbm [shape: f32[2,16,32], index: 2, kind: output, shape index: {}]
  %s3 = sld [smem:[#allocation0]]
  $region41: #{tpu_custom_call.1} parent=0
    _
  %s5 = ssub.s32 1, %s3
  %s6 = scalar_select 0, %s5, %s3
  $region1: #{tpu_custom_call.1} parent=0
    #allocation2 [shape = 'u8[16384]{0}', space=vmem, size = 0x4000, scoped, tag = 'output window, operand 0']
    #allocation3 [shape = 's32[2]{0}', space=sflag, size = 0x8, scoped, tag = 'scoped memory for tpu_custom_call.1']
    %7 = vsyncpa [#allocation3], 0
    %s8 = scalar_lea.sflag [#allocation3], 1
    %9 = vsyncpa %s8, 0
    loop: start=0, step=1, limit=4
    $region2: #{tpu_custom_call.1} parent=1 // loop_pre_header
      _
    $region3: #{tpu_custom_call.1} parent=1 // loop_header
      %s11 = sphi 0, %s15
      %p12 = scmp.ge.s32.totalorder %s11, 4
      %s18 = sphi 0, %s30
      %s19 = sphi 0, %s26
      %s20 = sphi 0, %s18
      %s21 = sphi 0, %s19
      %s22 = sphi 0, %s20
      %s23 = sphi 0, %s21
      %s33 = sphi 0, %s35
      %s36 = sphi 0, %s33
      %s37 = sphi 0, %s36
      %s53 = sphi 0, %s37
      %s57 = sphi 0, %s57
      %s59 = sphi 0, %s57
      %s60 = sphi 0, %s59
      %s74 = sphi 0, %s60
      %s82 = sphi 0, %s84
      %s85 = sphi 0, %s82
      %s86 = sphi 0, %s85
      %s102 = sphi 0, %s86
    $region4: #{tpu_custom_call.1} parent=1 // loop_header_branch
      %14 = sbr.rel (%p12) target = $region8
    $region5: #{tpu_custom_call.1} parent=1 // loop_body
      %s16 = ssub.s32 %s11, 1
      %s17 = ssub.s32 %s11, 2
      %s24 = sadd.s32 1, %s19
      %p25 = scmp.ge.s32.totalorder %s24, 1
      %s26 = scalar_select %p25, 0, %s24
      %s27 = sadd.s32 1, %s18
      %s28 = scalar_select %p25, %s27, %s18
      %p29 = scmp.ge.s32.totalorder %s28, 2
      %s30 = scalar_select %p29, 0, %s28
      %s31 = ssub.s32 %s18, %s30
      %p32 = scmp.eq.s32.totalorder %s31, 0
      %s34 = sadd.s32 %s33, 1
      %s35 = scalar_select %p32, %s33, %s34
      %p38 = pneg %p32
      %p39 = scmp.eq.s32.totalorder %s11, 1
      %p40 = por %p38, %p39
      %p41 = scmp.ne.s32.totalorder %s33, %s36
      %p42 = scmp.eq.s32.totalorder %s11, 0
      %p43 = por %p41, %p42
      %p44 = scmp.ne.s32.totalorder %s33, %s36
      %p45 = scmp.eq.s32.totalorder %s16, 1
      %p46 = por %p44, %p45
      %p47 = scmp.ne.s32.totalorder %s36, %s37
      %p48 = scmp.eq.s32.totalorder %s16, 0
      %p49 = por %p47, %p48
      %p50 = scmp.ne.s32.totalorder %s36, %s37
      %p51 = scmp.eq.s32.totalorder %s17, 1
      %p52 = por %p50, %p51
      %p54 = scmp.ne.s32.totalorder %s37, %s53
      %p55 = scmp.eq.s32.totalorder %s17, 0
      %p56 = por %p54, %p55
      %s58 = sadd.s32 %s57, 1
      %p61 = scmp.eq.s32.totalorder %s11, 1
      %p62 = scmp.ne.s32.totalorder %s57, %s59
      %p63 = scmp.eq.s32.totalorder %s11, 0
      %p64 = por %p62, %p63
      %p65 = scmp.ne.s32.totalorder %s57, %s59
      %p66 = scmp.eq.s32.totalorder %s16, 1
      %p67 = por %p65, %p66
      %p68 = scmp.ne.s32.totalorder %s59, %s60
      %p69 = scmp.eq.s32.totalorder %s16, 0
      %p70 = por %p68, %p69
      %p71 = scmp.ne.s32.totalorder %s59, %s60
      %p72 = scmp.eq.s32.totalorder %s17, 1
      %p73 = por %p71, %p72
      %p75 = scmp.ne.s32.totalorder %s60, %s74
      %p76 = scmp.eq.s32.totalorder %s17, 0
      %p77 = por %p75, %p76
      %s78 = ssub.s32 %s18, %s30
      %s79 = ssub.s32 %s19, %s26
      %s80 = sor.u32 %s78, %s79
      %p81 = scmp.eq.s32.totalorder %s80, 0
      %s83 = sadd.s32 %s82, 1
      %s84 = scalar_select %p81, %s82, %s83
      %p87 = pneg %p81
      %p88 = scmp.eq.s32.totalorder %s11, 1
      %p89 = por %p87, %p88
      %p90 = scmp.ne.s32.totalorder %s82, %s85
      %p91 = scmp.eq.s32.totalorder %s11, 0
      %p92 = por %p90, %p91
      %p93 = scmp.ne.s32.totalorder %s82, %s85
      %p94 = scmp.eq.s32.totalorder %s16, 1
      %p95 = por %p93, %p94
      %p96 = scmp.ne.s32.totalorder %s85, %s86
      %p97 = scmp.eq.s32.totalorder %s16, 0
      %p98 = por %p96, %p97
      %p99 = scmp.ne.s32.totalorder %s85, %s86
      %p100 = scmp.eq.s32.totalorder %s17, 1
      %p101 = por %p99, %p100
      %p103 = scmp.ne.s32.totalorder %s86, %s102
      %p104 = scmp.eq.s32.totalorder %s17, 0
      %p105 = por %p103, %p104
      %p106 = scmp.le.s32.totalorder 1, %s11
      %p107 = scmp.lt.s32.totalorder %s11, 3
      %p108 = pnand %p106, %p107
      %p109 = pneg %p108
      // Predicated region
      $region9: #{tpu_custom_call.1} parent=5 // pred_check
        _
      $region10: #{tpu_custom_call.1} parent=5 // pred_check_branch
        %111 = sbr.rel (%p108) target = $region12
      $region11: #{tpu_custom_call.1} parent=5 // pred_region
        %s112 = ssub.s32 %s11, 1
        // Predicated region
        $region13: #{tpu_custom_call.1} parent=11 // pred_check
          %p113 = pneg %p70
        $region14: #{tpu_custom_call.1} parent=11 // pred_check_branch
          %115 = sbr.rel (%p113) target = $region16
        $region15: #{tpu_custom_call.1} parent=11 // pred_region
          _
        $region16: #{tpu_custom_call.1} parent=11 // pred_fallthru
          _
      $region12: #{tpu_custom_call.1} parent=5 // pred_fallthru
        _
      %p116 = scmp.lt.s32.totalorder %s11, 2
      // Predicated region
      $region17: #{tpu_custom_call.1} parent=5 // pred_check
        %p117 = pneg %p116
      $region18: #{tpu_custom_call.1} parent=5 // pred_check_branch
        %119 = sbr.rel (%p117) target = $region20
      $region19: #{tpu_custom_call.1} parent=5 // pred_region
        // Predicated region
        $region21: #{tpu_custom_call.1} parent=19 // pred_check
          %p120 = pneg %p43
        $region22: #{tpu_custom_call.1} parent=19 // pred_check_branch
          %122 = sbr.rel (%p120) target = $region24
        $region23: #{tpu_custom_call.1} parent=19 // pred_region
          %p123 = scmp.lt.s32.totalorder %s18, 1
          %s124 = scalar_select %p123, %s18, 1
          %s125 = smul.addr %s124, 3
          %s126 = smul.addr %s125, 8
          %s127 = scalar_lea.vmem %s0, %s126
        $region24: #{tpu_custom_call.1} parent=19 // pred_fallthru
          _
      $region20: #{tpu_custom_call.1} parent=5 // pred_fallthru
        _
      %p128 = scmp.le.s32.totalorder 1, %s11
      %p129 = scmp.lt.s32.totalorder %s11, 3
      %p130 = pnand %p128, %p129
      %p131 = pneg %p130
      // Predicated region
      $region25: #{tpu_custom_call.1} parent=5 // pred_check
        _
      $region26: #{tpu_custom_call.1} parent=5 // pred_check_branch
        %133 = sbr.rel (%p130) target = $region28
      $region27: #{tpu_custom_call.1} parent=5 // pred_region
        %s134 = ssub.s32 %s11, 1
        %p135 = scmp.lt.s32.totalorder %s20, 1
        %s136 = scalar_select %p135, %s20, 1
        %s137 = smul.addr %s136, 3
        %s138 = smul.addr %s137, 8
        %s139 = scalar_lea.vmem %s0, %s138
        %p140 = pneg %p49
        %p141 = pneg %p46
        %p142 = pneg %p70
        %p143 = pneg %p67
        %p144 = pneg %p98
        %p145 = pneg %p95
        %s146 = sand.u32 %s85, 1
        %s147 = scalar_lea.sflag [#allocation3], %s146
        %s148 = sand.u32 %s85, 1
        %s149 = smul.addr %s148, 16
        %s150 = scalar_lea.vmem [#allocation2], %s149
        %p151 = scmp.lt.s32.totalorder %s20, 1
        %s152 = scalar_select %p151, %s20, 1
        %s153 = smul.addr %s152, 3
        %s154 = smul.addr %s153, 8
        %s155 = scalar_lea.vmem %s0, %s154
        %s156 = smul.u32 2, %s21
        %s157 = smul.u32 %s21, 16
        %s158 = scalar_lea.vmem %s155, %s157
        %v159 = vld [vmem:[%s158] sm:$0xff]
        %v160 = vld [vmem:[%s158 + $0x8] sm:$0xff]
        %s161 = sadd.s32 %s157, 1
        %s162 = scalar_lea.vmem %s155, %s161
        %v163 = vld [vmem:[%s162] sm:$0xff]
        %v164 = vld [vmem:[%s162 + $0x8] sm:$0xff]
        %s165 = sadd.s32 %s157, 2
        %s166 = scalar_lea.vmem %s155, %s165
        %v167 = vld [vmem:[%s166] sm:$0xff]
        %v168 = vld [vmem:[%s166 + $0x8] sm:$0xff]
        %171 = vrot.lane.b32.xlu0 %v163, 4
        %v172 = vpop.permute.xlu0 %171
        %173 = vrot.lane.b32.xlu0 %v164, 4
        %v174 = vpop.permute.xlu0 %173
        %179 = vrot.lane.b32.xlu0 %v167, 8
        %v180 = vpop.permute.xlu0 %179
        %181 = vrot.lane.b32.xlu0 %v168, 8
        %v182 = vpop.permute.xlu0 %181
        %vm185 = vcmask 31744
        %v186 = vsel %vm185, %v159, %v172
        %v187 = vsel %vm185, %v160, %v174
        %vm188 = vcmask 64512
        %v189 = vsel %vm188, %v186, %v180
        %v190 = vsel %vm188, %v187, %v182
        %v191 = vld [vmem:[%s1] sm:$0xff]
        %v192 = vld [vmem:[%s1 + $0x8] sm:$0xf]
        %vm193 = vcmask 97280
        %v195 = vsel %vm193, %v189, 0
        %v198 = vsel %vm193, %v190, 0
        %vm200 = vcmask 1043456
        %v202 = vsel %vm200, %v192, 0
        %204 = vmatprep.subr.mxu0 0.0
        %205 = vmatpush1.msra.mxu0 %v191
        %206 = vmatprep.subr.mxu0 0.0
        %207 = vmatpush1.msra.mxu0 %v202
        %208 = vmatprep.subr.mxu0 0.0
        %209 = vmatpush1.msra.mxu0 0.0
        %210 = vmatprep.subr.mxu0 0.0
        %211 = vmatpush1.msra.mxu0 0.0
        %212 = vmatprep.subr.mxu0 0.0
        %213 = vmatpush1.msra.mxu0 0.0
        %214 = vmatprep.subr.mxu0 0.0
        %215 = vmatpush1.msra.mxu0 0.0
        %216 = vmatprep.subr.mxu0 0.0
        %217 = vmatpush1.msra.mxu0 0.0
        %218 = vmatprep.subr.mxu0 0.0
        %219 = vmatpush1.msra.mxu0 0.0
        %220 = vmatprep.subr.mxu0 0.0
        %221 = vmatpush1.msra.mxu0 0.0
        %222 = vmatprep.subr.mxu0 0.0
        %223 = vmatpush1.msra.mxu0 0.0
        %224 = vmatprep.subr.mxu0 0.0
        %225 = vmatpush1.msra.mxu0 0.0
        %226 = vmatprep.subr.mxu0 0.0
        %227 = vmatpush1.msra.mxu0 0.0
        %228 = vmatprep.subr.mxu0 0.0
        %229 = vmatpush1.msra.mxu0 0.0
        %230 = vmatprep.subr.mxu0 0.0
        %231 = vmatpush1.msra.mxu0 0.0
        %232 = vmatprep.subr.mxu0 0.0
        %233 = vmatpush1.msra.mxu0 0.0
        %234 = vmatprep.subr.mxu0 0.0
        %235 = vmatpush1.msra.mxu0 0.0
        %236 = vmatprep.subr.mxu0 0.0
        %237 = vmatpush1.msra.mxu0 0.0
        %238 = vmatprep.subr.mxu0 0.0
        %239 = vmatpush1.msra.mxu0 0.0
        %240 = vmatprep.subr.mxu0 0.0
        %241 = vmatpush1.msra.mxu0 0.0
        %242 = vmatprep.subr.mxu0 0.0
        %243 = vmatpush1.msra.mxu0 0.0
        %244 = vmatprep.subr.mxu0 0.0
        %245 = vmatpush1.msra.mxu0 0.0
        %246 = vmatprep.subr.mxu0 0.0
        %247 = vmatpush1.msra.mxu0 0.0
        %248 = vmatprep.subr.mxu0 0.0
        %249 = vmatpush1.msra.mxu0 0.0
        %250 = vmatprep.subr.mxu0 0.0
        %251 = vmatpush1.msra.mxu0 0.0
        %252 = vmatprep.subr.mxu0 0.0
        %253 = vmatpush1.msra.mxu0 0.0
        %254 = vmatprep.subr.mxu0 0.0
        %255 = vmatpush1.msra.mxu0 0.0
        %256 = vmatprep.subr.mxu0 0.0
        %257 = vmatpush1.msra.mxu0 0.0
        %258 = vmatprep.subr.mxu0 0.0
        %259 = vmatpush1.msra.mxu0 0.0
        %260 = vmatprep.subr.mxu0 0.0
        %261 = vmatpush1.msra.mxu0 0.0
        %262 = vmatprep.subr.mxu0 0.0
        %263 = vmatpush1.msra.mxu0 0.0
        %264 = vmatprep.subr.mxu0 0.0
        %265 = vmatpush1.msra.mxu0 0.0
        %266 = vmatprep.subr.mxu0 0.0
        %267 = vmatpush1.msra.mxu0 0.0
        %268 = vmatprep.mubr.f32.mxu0 0.0
        %269 = vmatmul.mubr.f32.gmra.mrb[0].mxu0 %v195
        %v270 = vpop.f32.mrb[0].mxu0
        %v271 = vadd.f32 0.0, %v270
        %v272 = vpop.f32.mrb[0].mxu0
        %273 = vmatprep.mubr.f32.mxu0 0.0
        %274 = vmatmul.mubr.f32.gmra.mrb[0].mxu0 %v198
        %v275 = vpop.f32.mrb[0].mxu0
        %v276 = vadd.f32 0.0, %v275
        %v277 = vpop.f32.mrb[0].mxu0
        %278 = vdwg.mxu0
        %vm279 = vcmask 261120
        %280 = vst.msk [vmem:[%s150] sm:$0xff] %vm279, %v271
        %281 = vst.msk [vmem:[%s150 + $0x8] sm:$0xff] %vm279, %v276
        %s282 = sand.u32 %s85, 1
        %s283 = scalar_lea.sflag [#allocation3], %s282
        %s284 = sand.u32 %s85, 1
        %s285 = smul.addr %s284, 16
        %s286 = scalar_lea.vmem [#allocation2], %s285
        // Predicated region
        $region29: #{tpu_custom_call.1} parent=27 // pred_check
          %p287 = pneg %p95
        $region30: #{tpu_custom_call.1} parent=27 // pred_check_branch
          %289 = sbr.rel (%p287) target = $region32
        $region31: #{tpu_custom_call.1} parent=27 // pred_region
          %s290 = smul.u32 2, %s21
          %s292 = ssub.s32 256, 256
          %293 = vsyncadd %s283, %s292
          %s294 = smul.addr %s20, 2
          %s295 = sadd.s32 %s290, %s294
          %s296 = smul.addr %s295, 128
          %s297 = scalar_lea.hbm %s2, %s296
          %s298 = sshll.u32 %s286, 4
          %s299 = int_to_ptr.vmem [resolvable:$true] %s298
          %304 = dma.vmem_to_hbm [thread:$0]  %s299, 256, %s297, %s283, 128, 128, 8
        $region32: #{tpu_custom_call.1} parent=27 // pred_fallthru
          _
      $region28: #{tpu_custom_call.1} parent=5 // pred_fallthru
        _
      %p305 = scmp.le.s32.totalorder 2, %s11
      // Predicated region
      $region33: #{tpu_custom_call.1} parent=5 // pred_check
        %p306 = pneg %p305
      $region34: #{tpu_custom_call.1} parent=5 // pred_check_branch
        %308 = sbr.rel (%p306) target = $region36
      $region35: #{tpu_custom_call.1} parent=5 // pred_region
        %s309 = ssub.s32 %s11, 2
        // Predicated region
        $region37: #{tpu_custom_call.1} parent=35 // pred_check
          %p310 = pneg %p101
        $region38: #{tpu_custom_call.1} parent=35 // pred_check_branch
          %312 = sbr.rel (%p310) target = $region40
        $region39: #{tpu_custom_call.1} parent=35 // pred_region
          %s313 = sand.u32 %s86, 1
          %s314 = scalar_lea.sflag [#allocation3], %s313
          %s315 = sand.u32 %s86, 1
          %s316 = smul.addr %s315, 16
          %s317 = scalar_lea.vmem [#allocation2], %s316
          %318 = dma.done %s314, 256
        $region40: #{tpu_custom_call.1} parent=35 // pred_fallthru
          _
      $region36: #{tpu_custom_call.1} parent=5 // pred_fallthru
        _
    $region6: #{tpu_custom_call.1} parent=1 // loop_footer
      %s15 = sadd.s32 1, %s11
    $region7: #{tpu_custom_call.1} parent=1 // loop_footer_branch
      %10 = sbr.rel target = $region3
    $region8: #{tpu_custom_call.1} parent=1 // loop_exit
      _
    %319 = vsyncpa [#allocation3], 1
    %s320 = scalar_lea.sflag [#allocation3], 1
    %321 = vsyncpa %s320, 1

</llo_original>
